<compile_context>
chip_gen: v7x
topology: tpu7x:2x2x1
jax: 0.10.0
libtpu: 0.0.40
codegen_flags: <defaults>
</compile_context>

<pallas_src>
import functools

import jax
import jax.numpy as jnp
import numpy as np
from jax.experimental import pallas as pl
from jax.experimental.pallas import tpu as pltpu

SMOOTH = 1e-07
_LANES = 128
_SUBLANES = 8
_INV_LN10 = 1.0 / float(np.log(10.0))


def _device_kind():
    try:
        return jax.devices()[0].device_kind.lower()
    except Exception:
        return ""


def _num_tensorcores():
    # Only v7x exposes 2 TensorCores per chip/device.  v5e/v6e are 1 TC, and
    # megacore chips present a single fused core, so they take the plain
    # single-axis path (no dead grid steps, no clamp/mask machinery).
    return 2 if "7" in _device_kind() else 1


def _max_tile_rows():
    # v5-family default scoped VMEM is 16 MiB -> cap input blocks at 2 MiB
    # each (2 inputs x 2 buffers = 8 MiB).  v6e/v7x default is 32 MiB ->
    # 4 MiB blocks (16 MiB total double-buffered), well under the limit.
    if "v5" in _device_kind():
        return 4096
    return 8192


def _logrmse_kernel(p_ref, t_ref, acc_ref, *, smooth, step_axis):
    step = pl.program_id(step_axis)

    @pl.when(step == 0)
    def _init():
        acc_ref[...] = jnp.zeros_like(acc_ref)

    p = p_ref[...].astype(jnp.float32)
    t = t_ref[...].astype(jnp.float32)

    pos = t != 0.0                       # mask[targets != 0] = 1
    mask = pos.astype(jnp.float32)
    # F.threshold(preds, 0, 0) == max(preds, 0); preds*mask done as a select.
    p_s = jnp.where(pos, jnp.maximum(p, 0.0), 0.0)
    # targets*mask == targets (targets are exactly 0 where mask is 0).
    # Natural logs in the hot loop; 1/ln(10) scaling is applied once in the
    # glue (saves a VALU multiply per element).  Where mask == 0 both log
    # arguments equal `smooth`, so r == 0 exactly, as in the reference.
    r = jnp.log(p_s + smooth) - jnp.log(t + smooth)

    tm = p_ref.shape[0]

    def fold(x):
        # (tm, 128) -> (8, 128): sum whole-vreg groups along the leading axis.
        # Pure VPU adds; the reshape splits exactly at sublane-tile boundaries
        # so it is layout-preserving (no VMEM copy).
        return jnp.sum(x.reshape(tm // _SUBLANES, _SUBLANES, _LANES), axis=0)

    acc_ref[0] += fold(mask)     # num_pos partials
    acc_ref[1] += fold(r)        # sum(ln r) partials
    acc_ref[2] += fold(r * r)    # sum((ln r)^2) partials


def log_rmse_loss(preds, targets, smooth=SMOOTH):
    assert preds.shape == targets.shape
    total = int(np.prod(preds.shape))

    p_flat = preds.reshape(-1)
    t_flat = targets.reshape(-1)

    tile = _SUBLANES * _LANES                 # 1024 elements per (8, 128) tile
    rows = (total // tile) * _SUBLANES        # full vreg rows available
    tm_max = _max_tile_rows()
    ncores = _num_tensorcores()

    tm = min(tm_max, rows) if rows else 0     # multiple of 8
    nblocks = rows // tm if tm else 0         # full blocks only
    if ncores > 1 and nblocks >= ncores:
        nblocks = (nblocks // ncores) * ncores
    else:
        ncores = 1

    num_pos = jnp.float32(0.0)
    sum_rl = jnp.float32(0.0)
    sum_rl2 = jnp.float32(0.0)

    if nblocks > 0:
        main_rows = nblocks * tm
        main = main_rows * _LANES
        p2 = p_flat[:main].reshape(main_rows, _LANES)
        t2 = t_flat[:main].reshape(main_rows, _LANES)

        kernel = functools.partial(
            _logrmse_kernel, smooth=float(smooth),
            step_axis=1 if ncores > 1 else 0)

        if ncores > 1:
            bpc = nblocks // ncores           # exact: nblocks is a multiple
            grid = (ncores, bpc)
            in_spec = pl.BlockSpec((tm, _LANES),
                                   lambda c, i, bpc=bpc: (c * bpc + i, 0))
            out_spec = pl.BlockSpec((None, 3, _SUBLANES, _LANES),
                                    lambda c, i: (c, 0, 0, 0))
            out_shape = jax.ShapeDtypeStruct(
                (ncores, 3, _SUBLANES, _LANES), jnp.float32)
            dims = (pltpu.CORE_PARALLEL, pltpu.ARBITRARY)
        else:
            grid = (nblocks,)
            in_spec = pl.BlockSpec((tm, _LANES), lambda i: (i, 0))
            out_spec = pl.BlockSpec((3, _SUBLANES, _LANES),
                                    lambda i: (0, 0, 0))
            out_shape = jax.ShapeDtypeStruct(
                (3, _SUBLANES, _LANES), jnp.float32)
            dims = ("arbitrary",)

        acc = pl.pallas_call(
            kernel,
            out_shape=out_shape,
            grid_spec=pltpu.PrefetchScalarGridSpec(
                num_scalar_prefetch=0,
                grid=grid,
                in_specs=[in_spec, in_spec],
                out_specs=out_spec),
            compiler_params=pltpu.CompilerParams(dimension_semantics=dims),
        )(p2, t2)

        # Single cross-lane/sublane reduction, done once outside the hot loop.
        acc = acc.reshape(-1, 3, _SUBLANES, _LANES)
        num_pos = num_pos + jnp.sum(acc[:, 0])
        sum_rl = sum_rl + jnp.sum(acc[:, 1])
        sum_rl2 = sum_rl2 + jnp.sum(acc[:, 2])
        tail_start = main
    else:
        tail_start = 0

    if tail_start < total:
        # Leftover (< one kernel block) handled in plain JAX: reads only the
        # tail slice, no full-array padding copy of the inputs.
        pt = p_flat[tail_start:].astype(jnp.float32)
        tt = t_flat[tail_start:].astype(jnp.float32)
        post = tt != 0.0
        rt = (jnp.log(jnp.where(post, jnp.maximum(pt, 0.0), 0.0) + smooth)
              - jnp.log(tt + smooth))
        num_pos = num_pos + jnp.sum(post.astype(jnp.float32))
        sum_rl = sum_rl + jnp.sum(rt)
        sum_rl2 = sum_rl2 + jnp.sum(rt * rt)

    sum_r = sum_rl * _INV_LN10
    sum_r2 = sum_rl2 * (_INV_LN10 * _INV_LN10)

    denom = jnp.where(num_pos != 0.0, num_pos, jnp.float32(1.0))  # safe divide
    loss = sum_r2 / denom - (0.5 * sum_r / denom) ** 2
    return jnp.where(num_pos != 0.0, loss, jnp.float32(0.0))


def _log_rmse_loss_ref(preds, targets, smooth=SMOOTH):
    # Faithful JAX translation of the PyTorch module (two log10 calls).
    p = jnp.maximum(preds.astype(jnp.float32), 0.0)
    t = targets.astype(jnp.float32)
    mask = (t != 0.0).astype(jnp.float32)
    r = jnp.log10(p * mask + smooth) - jnp.log10(t * mask + smooth)
    num_pos = jnp.sum(mask)
    denom = jnp.where(num_pos != 0.0, num_pos, 1.0)
    loss = jnp.sum(r * r) / denom - (0.5 * jnp.sum(r) / denom) ** 2
    return jnp.where(num_pos != 0.0, loss, jnp.float32(0.0))


if __name__ == "__main__":
    key = jax.random.PRNGKey(0)
    kp, kt, km = jax.random.split(key, 3)
    shape = (2, 4, 16, 16)  # N, C, H, W  -> 2048 elements (aligned case)

    # preds include negatives (exercise the threshold); targets include exact
    # zeros (exercise the mask / num_pos path).
    preds = jax.random.normal(kp, shape, dtype=jnp.float32)
    targets = jax.random.uniform(kt, shape, dtype=jnp.float32,
                                 minval=0.0, maxval=10.0)
    targets = targets * (jax.random.uniform(km, shape) > 0.3).astype(jnp.float32)

    out = log_rmse_loss(preds, targets)
    jax.block_until_ready(out)
    ref = _log_rmse_loss_ref(preds, targets)
    np.testing.assert_allclose(np.asarray(out), np.asarray(ref),
                               rtol=1e-4, atol=1e-5)

    # Ragged case: non-multiple-of-1024 numel exercises the kernel prefix +
    # pure-JAX tail path (no padding copies anywhere).
    shape2 = (3, 5, 7, 11)  # 1155 elements
    kp2, kt2, km2 = jax.random.split(jax.random.PRNGKey(1), 3)
    preds2 = jax.random.normal(kp2, shape2, dtype=jnp.float32)
    targets2 = jax.random.uniform(kt2, shape2, dtype=jnp.float32,
                                  minval=0.0, maxval=10.0)
    targets2 = targets2 * (jax.random.uniform(km2, shape2) > 0.3).astype(jnp.float32)

    out2 = log_rmse_loss(preds2, targets2)
    jax.block_until_ready(out2)
    ref2 = _log_rmse_loss_ref(preds2, targets2)
    np.testing.assert_allclose(np.asarray(out2), np.asarray(ref2),
                               rtol=1e-4, atol=1e-5)

    print("KERNEL_OK")
</pallas_src>

<mosaic_0001>
module attributes {stable_mosaic.version = 11 : i64} {
  func.func @_logrmse_kernel(%arg0: i32, %arg1: memref<16x128xf32, #tpu.memory_space<vmem>>, %arg2: memref<16x128xf32, #tpu.memory_space<vmem>>, %arg3: memref<3x8x128xf32, #tpu.memory_space<vmem>>) attributes {dimension_semantics = [#tpu.dimension_semantics<arbitrary>], iteration_bounds = array<i64: 1>, scalar_prefetch = 0 : i64, scratch_operands = 0 : i64, tpu.core_type = #tpu.core_type<tc>, window_params = [{transform_indices = @transform_0, window_bounds = array<i64: 16, 128>}, {transform_indices = @transform_1, window_bounds = array<i64: 16, 128>}, {pipeline_mode = #tpu.pipeline_mode<synchronous>, transform_indices = @transform_2, window_bounds = array<i64: 3, 8, 128>}]} {
    %c0_i32 = arith.constant 0 : i32
    %0 = arith.cmpi eq, %arg0, %c0_i32 : i32
    %1 = arith.extui %0 : i1 to i32
    %c0_i32_0 = arith.constant 0 : i32
    %2 = arith.cmpi ne, %1, %c0_i32_0 : i32
    scf.if %2 {
      %cst_27 = arith.constant 0.000000e+00 : f32
      %45 = vector.broadcast %cst_27 : f32 to vector<3x8x128xf32>
      %c0_28 = arith.constant 0 : index
      %c0_29 = arith.constant 0 : index
      %c0_30 = arith.constant 0 : index
      %46 = vector.load %arg3[%c0_28, %c0_29, %c0_30] : memref<3x8x128xf32, #tpu.memory_space<vmem>>, vector<3x8x128xf32>
      tpu.vector_store %arg3[%c0_28, %c0_29, %c0_30], %45 {strides = array<i32>} : memref<3x8x128xf32, #tpu.memory_space<vmem>>, vector<3x8x128xf32>,
    } else {
    }
    %c0 = arith.constant 0 : index
    %c0_1 = arith.constant 0 : index
    %3 = vector.load %arg1[%c0, %c0_1] : memref<16x128xf32, #tpu.memory_space<vmem>>, vector<16x128xf32>
    %c0_2 = arith.constant 0 : index
    %c0_3 = arith.constant 0 : index
    %4 = vector.load %arg2[%c0_2, %c0_3] : memref<16x128xf32, #tpu.memory_space<vmem>>, vector<16x128xf32>
    %cst = arith.constant 0.000000e+00 : f32
    %5 = vector.broadcast %cst : f32 to vector<16x128xf32>
    %6 = arith.cmpf one, %4, %5 : vector<16x128xf32>
    %7 = arith.extui %6 : vector<16x128xi1> to vector<16x128xi32>
    %8 = arith.sitofp %7 : vector<16x128xi32> to vector<16x128xf32>
    %cst_4 = arith.constant 0.000000e+00 : f32
    %9 = vector.broadcast %cst_4 : f32 to vector<16x128xf32>
    %10 = arith.maximumf %3, %9 : vector<16x128xf32>
    %cst_5 = arith.constant 0.000000e+00 : f32
    %11 = vector.broadcast %cst_5 : f32 to vector<16x128xf32>
    %12 = arith.select %6, %10, %11 : vector<16x128xi1>, vector<16x128xf32>
    %cst_6 = arith.constant 1.000000e-07 : f32
    %13 = vector.broadcast %cst_6 : f32 to vector<16x128xf32>
    %14 = arith.addf %12, %13 : vector<16x128xf32>
    %15 = math.log %14 : vector<16x128xf32>
    %cst_7 = arith.constant 1.000000e-07 : f32
    %16 = vector.broadcast %cst_7 : f32 to vector<16x128xf32>
    %17 = arith.addf %4, %16 : vector<16x128xf32>
    %18 = math.log %17 : vector<16x128xf32>
    %19 = arith.subf %15, %18 : vector<16x128xf32>
    %c0_8 = arith.constant 0 : index
    %c0_9 = arith.constant 0 : index
    %c0_10 = arith.constant 0 : index
    %20 = vector.load %arg3[%c0_8, %c0_9, %c0_10] : memref<3x8x128xf32, #tpu.memory_space<vmem>>, vector<1x8x128xf32>
    %21 = vector.shape_cast %20 : vector<1x8x128xf32> to vector<8x128xf32>
    %22 = vector.shape_cast %8 : vector<16x128xf32> to vector<2x8x128xf32>
    %cst_11 = arith.constant dense<0.000000e+00> : vector<8x128xf32>
    %23 = vector.multi_reduction <add>, %22, %cst_11 [0] : vector<2x8x128xf32> to vector<8x128xf32>
    %24 = arith.addf %21, %23 : vector<8x128xf32>
    %c0_12 = arith.constant 0 : index
    %c0_13 = arith.constant 0 : index
    %c0_14 = arith.constant 0 : index
    %25 = vector.load %arg3[%c0_12, %c0_13, %c0_14] : memref<3x8x128xf32, #tpu.memory_space<vmem>>, vector<1x8x128xf32>
    %26 = vector.shape_cast %25 : vector<1x8x128xf32> to vector<8x128xf32>
    %27 = vector.shape_cast %24 : vector<8x128xf32> to vector<1x8x128xf32>
    tpu.vector_store %arg3[%c0_12, %c0_13, %c0_14], %27 {strides = array<i32>} : memref<3x8x128xf32, #tpu.memory_space<vmem>>, vector<1x8x128xf32>,
    %c1 = arith.constant 1 : index
    %c0_15 = arith.constant 0 : index
    %c0_16 = arith.constant 0 : index
    %28 = vector.load %arg3[%c1, %c0_15, %c0_16] : memref<3x8x128xf32, #tpu.memory_space<vmem>>, vector<1x8x128xf32>
    %29 = vector.shape_cast %28 : vector<1x8x128xf32> to vector<8x128xf32>
    %30 = vector.shape_cast %19 : vector<16x128xf32> to vector<2x8x128xf32>
    %cst_17 = arith.constant dense<0.000000e+00> : vector<8x128xf32>
    %31 = vector.multi_reduction <add>, %30, %cst_17 [0] : vector<2x8x128xf32> to vector<8x128xf32>
    %32 = arith.addf %29, %31 : vector<8x128xf32>
    %c1_18 = arith.constant 1 : index
    %c0_19 = arith.constant 0 : index
    %c0_20 = arith.constant 0 : index
    %33 = vector.load %arg3[%c1_18, %c0_19, %c0_20] : memref<3x8x128xf32, #tpu.memory_space<vmem>>, vector<1x8x128xf32>
    %34 = vector.shape_cast %33 : vector<1x8x128xf32> to vector<8x128xf32>
    %35 = vector.shape_cast %32 : vector<8x128xf32> to vector<1x8x128xf32>
    tpu.vector_store %arg3[%c1_18, %c0_19, %c0_20], %35 {strides = array<i32>} : memref<3x8x128xf32, #tpu.memory_space<vmem>>, vector<1x8x128xf32>,
    %c2 = arith.constant 2 : index
    %c0_21 = arith.constant 0 : index
    %c0_22 = arith.constant 0 : index
    %36 = vector.load %arg3[%c2, %c0_21, %c0_22] : memref<3x8x128xf32, #tpu.memory_space<vmem>>, vector<1x8x128xf32>
    %37 = vector.shape_cast %36 : vector<1x8x128xf32> to vector<8x128xf32>
    %38 = arith.mulf %19, %19 : vector<16x128xf32>
    %39 = vector.shape_cast %38 : vector<16x128xf32> to vector<2x8x128xf32>
    %cst_23 = arith.constant dense<0.000000e+00> : vector<8x128xf32>
    %40 = vector.multi_reduction <add>, %39, %cst_23 [0] : vector<2x8x128xf32> to vector<8x128xf32>
    %41 = arith.addf %37, %40 : vector<8x128xf32>
    %c2_24 = arith.constant 2 : index
    %c0_25 = arith.constant 0 : index
    %c0_26 = arith.constant 0 : index
    %42 = vector.load %arg3[%c2_24, %c0_25, %c0_26] : memref<3x8x128xf32, #tpu.memory_space<vmem>>, vector<1x8x128xf32>
    %43 = vector.shape_cast %42 : vector<1x8x128xf32> to vector<8x128xf32>
    %44 = vector.shape_cast %41 : vector<8x128xf32> to vector<1x8x128xf32>
    tpu.vector_store %arg3[%c2_24, %c0_25, %c0_26], %44 {strides = array<i32>} : memref<3x8x128xf32, #tpu.memory_space<vmem>>, vector<1x8x128xf32>,
    return
  }
  func.func @transform_0(%arg0: i32) -> (i32, i32) {
    %c0_i32 = arith.constant 0 : i32
    %c0_i32_0 = arith.constant 0 : i32
    return %arg0, %c0_i32 : i32, i32
  }
  func.func @transform_1(%arg0: i32) -> (i32, i32) {
    %c0_i32 = arith.constant 0 : i32
    %c0_i32_0 = arith.constant 0 : i32
    return %arg0, %c0_i32 : i32, i32
  }
  func.func @transform_2(%arg0: i32) -> (i32, i32, i32) {
    %c0_i32 = arith.constant 0 : i32
    %c0_i32_0 = arith.constant 0 : i32
    %c0_i32_1 = arith.constant 0 : i32
    %c0_i32_2 = arith.constant 0 : i32
    return %c0_i32, %c0_i32_0, %c0_i32_1 : i32, i32, i32
  }
}

</mosaic_0001>

<llo_original>
// kernel: tpu_custom_call.1
$region0: #{tpu_custom_call.1}
  #allocation0 [shape = 'u32[]', space=smem, size = 0x4, offset = 0x4, fixed_abs, tag = 'smem constant byte address 0x4 - core index']
  #allocation1 [shape = 'u32[144,128]{1,0:T(1,128)}', space=vmem, size = 0x12000, scoped, tag = 'internal scratch']
  %s0 = inlined_call_operand.hbm [shape: f32[16,128], index: 0, kind: input, shape index: {}]
  %s1 = inlined_call_operand.hbm [shape: f32[16,128], index: 1, kind: input, shape index: {}]
  %s2 = inlined_call_operand.hbm [shape: f32[3,8,128], index: 2, kind: output, shape index: {}]
  %s3 = sld [smem:[#allocation0]]
  $region30: #{tpu_custom_call.1} parent=0
    _
  %s5 = ssub.s32 1, %s3
  %s6 = scalar_select 0, %s5, %s3
  $region1: #{tpu_custom_call.1} parent=0
    #allocation2 [shape = 'u8[8192]{0}', space=vmem, size = 0x2000, scoped, tag = 'input window, operand 0, single buffered']
    #allocation3 [shape = 's32[1]{0}', space=sflag, size = 0x4, scoped, tag = 'scoped memory for tpu_custom_call.1']
    #allocation4 [shape = 's32[1]{0}', space=sflag, size = 0x4, scoped, tag = 'scoped memory for tpu_custom_call.1']
    #allocation5 [shape = 'u8[8192]{0}', space=vmem, size = 0x2000, scoped, tag = 'input window, operand 1, single buffered']
    #allocation6 [shape = 's32[1]{0}', space=sflag, size = 0x4, scoped, tag = 'scoped memory for tpu_custom_call.1']
    #allocation7 [shape = 'u8[12288]{0}', space=vmem, size = 0x3000, scoped, tag = 'output window, operand 0, single buffered']
    %7 = vsyncpa [#allocation3], 0
    %8 = vsyncpa [#allocation6], 0
    %9 = vsyncpa [#allocation4], 0
    // Predicated region
    $region2: #{tpu_custom_call.1} parent=1 // pred_check
      _
    $region3: #{tpu_custom_call.1} parent=1 // pred_check_branch
      %11 = sbr.rel (0) target = $region5
    $region4: #{tpu_custom_call.1} parent=1 // pred_region
      %s13 = ssub.s32 256, 256
      %14 = vsyncadd [#allocation3], %s13
      %s15 = sshll.u32 [#allocation2], 4
      %s16 = int_to_ptr.vmem [resolvable:$true] %s15
      %21 = dma.hbm_to_vmem [thread:$0]  %s0, 256, %s16, [#allocation3], 128, 128, 8
    $region5: #{tpu_custom_call.1} parent=1 // pred_fallthru
      _
    // Predicated region
    $region6: #{tpu_custom_call.1} parent=1 // pred_check
      _
    $region7: #{tpu_custom_call.1} parent=1 // pred_check_branch
      %23 = sbr.rel (0) target = $region9
    $region8: #{tpu_custom_call.1} parent=1 // pred_region
      %s25 = ssub.s32 256, 256
      %26 = vsyncadd [#allocation6], %s25
      %s27 = sshll.u32 [#allocation5], 4
      %s28 = int_to_ptr.vmem [resolvable:$true] %s27
      %33 = dma.hbm_to_vmem [thread:$0]  %s1, 256, %s28, [#allocation6], 128, 128, 8
    $region9: #{tpu_custom_call.1} parent=1 // pred_fallthru
      _
    // Predicated region
    $region10: #{tpu_custom_call.1} parent=1 // pred_check
      _
    $region11: #{tpu_custom_call.1} parent=1 // pred_check_branch
      %35 = sbr.rel (0) target = $region13
    $region12: #{tpu_custom_call.1} parent=1 // pred_region
      %36 = dma.done [#allocation3], 256
    $region13: #{tpu_custom_call.1} parent=1 // pred_fallthru
      _
    // Predicated region
    $region14: #{tpu_custom_call.1} parent=1 // pred_check
      _
    $region15: #{tpu_custom_call.1} parent=1 // pred_check_branch
      %38 = sbr.rel (0) target = $region17
    $region16: #{tpu_custom_call.1} parent=1 // pred_region
      %39 = dma.done [#allocation6], 256
    $region17: #{tpu_custom_call.1} parent=1 // pred_fallthru
      _
    %p40 = scmp.eq.s32.totalorder 0, 0
    // Predicated region
    $region18: #{tpu_custom_call.1} parent=1 // pred_check
      %p41 = pneg %p40
    $region19: #{tpu_custom_call.1} parent=1 // pred_check_branch
      %43 = sbr.rel (%p41) target = $region21
    $region20: #{tpu_custom_call.1} parent=1 // pred_region
      %44 = vst [vmem:[#allocation7] sm:$0xff] 0.0
      %45 = vst [vmem:[#allocation7 + $0x8] sm:$0xff] 0.0
      %46 = vst [vmem:[#allocation7 + $0x10] sm:$0xff] 0.0
    $region21: #{tpu_custom_call.1} parent=1 // pred_fallthru
      _
    %v47 = vld [vmem:[#allocation2] sm:$0xff]
    %v48 = vld [vmem:[#allocation2 + $0x8] sm:$0xff]
    %v49 = vld [vmem:[#allocation5] sm:$0xff]
    %v50 = vld [vmem:[#allocation5 + $0x8] sm:$0xff]
    %vm51 = vcmp.ne.f32.partialorder %v49, 0.0
    %vm52 = vcmp.ne.f32.partialorder %v50, 0.0
    %v53 = vsel %vm51, 1, 0
    %v54 = vsel %vm52, 1, 0
    %v55 = vcvt.s32.f32 %v53
    %v56 = vcvt.s32.f32 %v54
    %v57 = vmax.f32 %v47, 0.0
    %v58 = vmax.f32 %v48, 0.0
    %v59 = vsel %vm51, %v57, 0.0
    %v60 = vsel %vm52, %v58, 0.0
    %v61 = vadd.f32 %v59, 1e-07
    %v62 = vadd.f32 %v60, 1e-07
    %v63 = vlog2.pop %v61
    %v64 = vmul.f32 %v63, 0.6931472
    %v65 = vlog2.pop %v62
    %v66 = vmul.f32 %v65, 0.6931472
    %v67 = vadd.f32 %v49, 1e-07
    %v68 = vadd.f32 %v50, 1e-07
    %v69 = vlog2.pop %v67
    %v70 = vmul.f32 %v69, 0.6931472
    %v71 = vlog2.pop %v68
    %v72 = vmul.f32 %v71, 0.6931472
    %v73 = vsub.f32 %v64, %v70
    %v74 = vsub.f32 %v66, %v72
    %v75 = vld [vmem:[#allocation7] sm:$0xff]
    %v76 = vadd.f32 %v55, %v56
    %v77 = vadd.f32 %v75, %v76
    %78 = vst [vmem:[#allocation7] sm:$0xff] %v77
    %s79 = scalar_lea.vmem [#allocation7], 8
    %v80 = vld [vmem:[%s79] sm:$0xff]
    %v81 = vadd.f32 %v73, %v74
    %v82 = vadd.f32 %v80, %v81
    %83 = vst [vmem:[%s79] sm:$0xff] %v82
    %s84 = scalar_lea.vmem [#allocation7], 16
    %v85 = vld [vmem:[%s84] sm:$0xff]
    %v86 = vmul.f32 %v73, %v73
    %v87 = vmul.f32 %v74, %v74
    %v88 = vadd.f32 %v86, %v87
    %v89 = vadd.f32 %v85, %v88
    %90 = vst [vmem:[%s84] sm:$0xff] %v89
    // Predicated region
    $region22: #{tpu_custom_call.1} parent=1 // pred_check
      _
    $region23: #{tpu_custom_call.1} parent=1 // pred_check_branch
      %92 = sbr.rel (0) target = $region25
    $region24: #{tpu_custom_call.1} parent=1 // pred_region
      %s94 = ssub.s32 384, 384
      %95 = vsyncadd [#allocation4], %s94
      %s96 = sshll.u32 [#allocation7], 4
      %s97 = int_to_ptr.vmem [resolvable:$true] %s96
      %102 = dma.vmem_to_hbm [thread:$0]  %s97, 384, %s2, [#allocation4], 128, 128, 8
    $region25: #{tpu_custom_call.1} parent=1 // pred_fallthru
      _
    // Predicated region
    $region26: #{tpu_custom_call.1} parent=1 // pred_check
      _
    $region27: #{tpu_custom_call.1} parent=1 // pred_check_branch
      %104 = sbr.rel (0) target = $region29
    $region28: #{tpu_custom_call.1} parent=1 // pred_region
      %105 = dma.done [#allocation4], 384
    $region29: #{tpu_custom_call.1} parent=1 // pred_fallthru
      _
    %106 = vsyncpa [#allocation3], 1
    %107 = vsyncpa [#allocation6], 1
    %108 = vsyncpa [#allocation4], 1

</llo_original>
